<compile_context>
chip_gen: v7x
topology: tpu7x:2x2x1
jax: 0.10.0
libtpu: 0.0.40
codegen_flags: <defaults>
</compile_context>

<pallas_src>
import jax
import jax.numpy as jnp
from jax.experimental import pallas as pl
from jax.experimental.pallas import tpu as pltpu


def _normalize_transpose_kernel(x_ref, perm_ref, scale_ref, bias_ref, o_ref):
    """One (TILE_H, TILE_W) image tile: de-interleave channels + normalize.

    x_ref:     (TILE_H, TILE_W*C) uint8, lane-dense interleaved HWC rows.
    perm_ref:  (TILE_W*C, TILE_W*C) bf16 0/1 de-interleave permutation
               (block index constant across the grid -> loaded once).
    scale_ref: (C,) float32 per-channel scale in SMEM.
    bias_ref:  (C,) float32 per-channel bias  in SMEM.
    o_ref:     (C, TILE_H, TILE_W) float32 output tile (CHW layout).
    """
    C, _, tile_w = o_ref.shape
    # uint8 (0..255) is exact in bf16 and perm is 0/1, so the MXU
    # de-interleave below is exact.  Two-step cast keeps lowering simple.
    x = x_ref[...].astype(jnp.float32).astype(jnp.bfloat16)
    # y[:, c*TILE_W + w] == x[:, w*C + c]  -- channel-major columns per row.
    y = jnp.dot(x, perm_ref[...], preferred_element_type=jnp.float32)
    for c in range(C):  # C is tiny and static -> unrolled
        plane = y[:, c * tile_w:(c + 1) * tile_w]  # lane-dense (TILE_H, TILE_W)
        o_ref[c, :, :] = plane * scale_ref[c] + bias_ref[c]


def albumentation_wrapper_forward(image_hwc, mean, std, max_pixel_value=255.0,
                                  *, tile_h=1024, tile_w=128):
    """Pallas equivalent of AlbumentationWrapper([Normalize(...)]).forward.

    image_hwc: (H, W, C) uint8 image (HWC, as albumentations consumes it).
    returns:   (C, H, W) float32 array (CHW, like the returned torch tensor).
    """
    H, W, C = image_hwc.shape
    if image_hwc.dtype != jnp.uint8:
        raise ValueError("expected a uint8 HWC image (albumentations input)")
    if not (C == len(mean) == len(std)):
        raise ValueError("channel count must match len(mean) == len(std)")

    # albumentations Normalize: (img / max_pixel - mean) / std
    #   == img * (1 / (max_pixel * std)) + (-mean / std)
    mean = jnp.asarray(mean, jnp.float32)
    std = jnp.asarray(std, jnp.float32)
    scale = 1.0 / (max_pixel_value * std)
    bias = -mean / std

    # Tile sizing: TILE_W*C must be a multiple of 128 lanes (C=3 -> TILE_W a
    # multiple of 128) unless we take the full width; TILE_H a multiple of 8
    # unless it is the full height.  Keep TILE_W small (128) so the MXU
    # de-interleave stays far below the HBM roofline on all generations, and
    # use TILE_H as the pipelining knob.
    if W % 128 == 0:
        tile_w = max(128, (min(tile_w, W) // 128) * 128)
    else:
        tile_w = W  # TODO(synk): ragged widths fall back to full-width tiles.
    tile_h = min(tile_h, H)
    if tile_h != H:
        tile_h = max(8, (tile_h // 8) * 8)

    twc = tile_w * C
    # 0/1 de-interleave permutation: output column j = c*tile_w + w picks
    # input element k = w*C + c.
    j = jnp.arange(twc)
    k = (j % tile_w) * C + (j // tile_w)
    perm = (jnp.arange(twc)[:, None] == k[None, :]).astype(jnp.bfloat16)

    x2d = image_hwc.reshape(H, W * C)  # free: contiguous HWC -> lane-dense rows

    grid = (pl.cdiv(H, tile_h), pl.cdiv(W, tile_w))
    return pl.pallas_call(
        _normalize_transpose_kernel,
        out_shape=jax.ShapeDtypeStruct((C, H, W), jnp.float32),
        grid=grid,
        in_specs=[
            pl.BlockSpec((tile_h, twc), lambda h, w: (h, w)),      # image rows
            pl.BlockSpec((twc, twc), lambda h, w: (0, 0)),         # permutation (resident)
            pl.BlockSpec(memory_space=pltpu.MemorySpace.SMEM),     # scale (C,)
            pl.BlockSpec(memory_space=pltpu.MemorySpace.SMEM),     # bias  (C,)
        ],
        out_specs=pl.BlockSpec((C, tile_h, tile_w), lambda h, w: (0, h, w)),
        compiler_params=pltpu.CompilerParams(
            dimension_semantics=("parallel", "parallel"),
            vmem_limit_bytes=32 * 1024 * 1024,
        ),
    )(x2d, perm, scale, bias)


def _reference_forward(image_hwc, mean, std, max_pixel_value=255.0):
    mean = jnp.asarray(mean, jnp.float32)
    std = jnp.asarray(std, jnp.float32)
    img = image_hwc.astype(jnp.float32)
    img = (img / max_pixel_value - mean) / std     # broadcast over channels
    return jnp.transpose(img, (2, 0, 1))           # HWC -> CHW


if __name__ == "__main__":
    key = jax.random.PRNGKey(0)
    H, W, C = 128, 256, 3  # small demo; with tile_h=64, tile_w=128 -> grid (2, 2)
    image = jax.random.randint(key, (H, W, C), 0, 256, dtype=jnp.int32).astype(jnp.uint8)

    # Deterministic "transform parameters" (albumentations Normalize defaults).
    mean = (0.485, 0.456, 0.406)
    std = (0.229, 0.224, 0.225)

    out = albumentation_wrapper_forward(image, mean, std, tile_h=64, tile_w=128)
    out = jax.block_until_ready(out)

    ref = _reference_forward(image, mean, std)
    assert out.shape == (C, H, W), out.shape
    assert out.dtype == jnp.float32, out.dtype
    assert jnp.allclose(out, ref, atol=1e-5, rtol=1e-5), "mismatch vs reference"

    print("KERNEL_OK")
</pallas_src>

<mosaic_0001>
module attributes {stable_mosaic.version = 11 : i64} {
  func.func @_normalize_transpose_kernel(%arg0: i32, %arg1: i32, %arg2: memref<64x384xi8, #tpu.memory_space<vmem>>, %arg3: memref<384x384xbf16, #tpu.memory_space<vmem>>, %arg4: memref<3xf32, #tpu.memory_space<smem>>, %arg5: memref<3xf32, #tpu.memory_space<smem>>, %arg6: memref<3x64x128xf32, #tpu.memory_space<vmem>>) attributes {dimension_semantics = [#tpu.dimension_semantics<parallel>, #tpu.dimension_semantics<parallel>], iteration_bounds = array<i64: 2, 2>, scalar_prefetch = 0 : i64, scratch_operands = 0 : i64, tpu.core_type = #tpu.core_type<tc>, window_params = [{transform_indices = @transform_0, window_bounds = array<i64: 64, 384>}, {pipeline_mode = #tpu.pipeline_mode<synchronous>, transform_indices = @transform_1, window_bounds = array<i64: 384, 384>}, {transform_indices = @transform_2, window_bounds = array<i64: 3>}, {transform_indices = @transform_3, window_bounds = array<i64: 3>}, {transform_indices = @transform_4, window_bounds = array<i64: 3, 64, 128>}]} {
    %c0 = arith.constant 0 : index
    %c0_0 = arith.constant 0 : index
    %0 = vector.load %arg2[%c0, %c0_0] : memref<64x384xi8, #tpu.memory_space<vmem>>, vector<64x384xi8>
    %1 = arith.uitofp %0 : vector<64x384xi8> to vector<64x384xf32>
    %2 = arith.truncf %1 : vector<64x384xf32> to vector<64x384xbf16>
    %c0_1 = arith.constant 0 : index
    %c0_2 = arith.constant 0 : index
    %3 = vector.load %arg3[%c0_1, %c0_2] : memref<384x384xbf16, #tpu.memory_space<vmem>>, vector<384x384xbf16>
    %cst = arith.constant dense<0.000000e+00> : vector<64x384xf32>
    %4 = tpu.matmul %2, %3, %cst {dimension_numbers = #tpu.dot_dimension_numbers<[1], [0], [0], [1], [0, 0, 1, 1], [], []>} : vector<64x384xbf16>, vector<384x384xbf16>, vector<64x384xf32> -> vector<64x384xf32>
    %5 = vector.extract_strided_slice %4 {offsets = [0, 0], sizes = [64, 128], strides = [1, 1]} : vector<64x384xf32> to vector<64x128xf32>
    %c0_3 = arith.constant 0 : index
    %6 = memref.load %arg4[%c0_3] : memref<3xf32, #tpu.memory_space<smem>>
    %7 = vector.broadcast %6 : f32 to vector<64x128xf32>
    %8 = arith.mulf %5, %7 : vector<64x128xf32>
    %c0_4 = arith.constant 0 : index
    %9 = memref.load %arg5[%c0_4] : memref<3xf32, #tpu.memory_space<smem>>
    %10 = vector.broadcast %9 : f32 to vector<64x128xf32>
    %11 = arith.addf %8, %10 : vector<64x128xf32>
    %c0_5 = arith.constant 0 : index
    %c0_6 = arith.constant 0 : index
    %c0_7 = arith.constant 0 : index
    %12 = vector.load %arg6[%c0_5, %c0_6, %c0_7] : memref<3x64x128xf32, #tpu.memory_space<vmem>>, vector<1x64x128xf32>
    %13 = vector.shape_cast %12 : vector<1x64x128xf32> to vector<64x128xf32>
    %14 = vector.shape_cast %11 : vector<64x128xf32> to vector<1x64x128xf32>
    tpu.vector_store %arg6[%c0_5, %c0_6, %c0_7], %14 {strides = array<i32>} : memref<3x64x128xf32, #tpu.memory_space<vmem>>, vector<1x64x128xf32>,
    %15 = vector.extract_strided_slice %4 {offsets = [0, 128], sizes = [64, 128], strides = [1, 1]} : vector<64x384xf32> to vector<64x128xf32>
    %c1 = arith.constant 1 : index
    %16 = memref.load %arg4[%c1] : memref<3xf32, #tpu.memory_space<smem>>
    %17 = vector.broadcast %16 : f32 to vector<64x128xf32>
    %18 = arith.mulf %15, %17 : vector<64x128xf32>
    %c1_8 = arith.constant 1 : index
    %19 = memref.load %arg5[%c1_8] : memref<3xf32, #tpu.memory_space<smem>>
    %20 = vector.broadcast %19 : f32 to vector<64x128xf32>
    %21 = arith.addf %18, %20 : vector<64x128xf32>
    %c1_9 = arith.constant 1 : index
    %c0_10 = arith.constant 0 : index
    %c0_11 = arith.constant 0 : index
    %22 = vector.load %arg6[%c1_9, %c0_10, %c0_11] : memref<3x64x128xf32, #tpu.memory_space<vmem>>, vector<1x64x128xf32>
    %23 = vector.shape_cast %22 : vector<1x64x128xf32> to vector<64x128xf32>
    %24 = vector.shape_cast %21 : vector<64x128xf32> to vector<1x64x128xf32>
    tpu.vector_store %arg6[%c1_9, %c0_10, %c0_11], %24 {strides = array<i32>} : memref<3x64x128xf32, #tpu.memory_space<vmem>>, vector<1x64x128xf32>,
    %25 = vector.extract_strided_slice %4 {offsets = [0, 256], sizes = [64, 128], strides = [1, 1]} : vector<64x384xf32> to vector<64x128xf32>
    %c2 = arith.constant 2 : index
    %26 = memref.load %arg4[%c2] : memref<3xf32, #tpu.memory_space<smem>>
    %27 = vector.broadcast %26 : f32 to vector<64x128xf32>
    %28 = arith.mulf %25, %27 : vector<64x128xf32>
    %c2_12 = arith.constant 2 : index
    %29 = memref.load %arg5[%c2_12] : memref<3xf32, #tpu.memory_space<smem>>
    %30 = vector.broadcast %29 : f32 to vector<64x128xf32>
    %31 = arith.addf %28, %30 : vector<64x128xf32>
    %c2_13 = arith.constant 2 : index
    %c0_14 = arith.constant 0 : index
    %c0_15 = arith.constant 0 : index
    %32 = vector.load %arg6[%c2_13, %c0_14, %c0_15] : memref<3x64x128xf32, #tpu.memory_space<vmem>>, vector<1x64x128xf32>
    %33 = vector.shape_cast %32 : vector<1x64x128xf32> to vector<64x128xf32>
    %34 = vector.shape_cast %31 : vector<64x128xf32> to vector<1x64x128xf32>
    tpu.vector_store %arg6[%c2_13, %c0_14, %c0_15], %34 {strides = array<i32>} : memref<3x64x128xf32, #tpu.memory_space<vmem>>, vector<1x64x128xf32>,
    return
  }
  func.func @transform_0(%arg0: i32, %arg1: i32) -> (i32, i32) {
    %c0_i32 = arith.constant 0 : i32
    return %arg0, %arg1 : i32, i32
  }
  func.func @transform_1(%arg0: i32, %arg1: i32) -> (i32, i32) {
    %c0_i32 = arith.constant 0 : i32
    %c0_i32_0 = arith.constant 0 : i32
    %c0_i32_1 = arith.constant 0 : i32
    return %c0_i32, %c0_i32_0 : i32, i32
  }
  func.func @transform_2(%arg0: i32, %arg1: i32) -> i32 {
    %c0_i32 = arith.constant 0 : i32
    %c0_i32_0 = arith.constant 0 : i32
    return %c0_i32 : i32
  }
  func.func @transform_3(%arg0: i32, %arg1: i32) -> i32 {
    %c0_i32 = arith.constant 0 : i32
    %c0_i32_0 = arith.constant 0 : i32
    return %c0_i32 : i32
  }
  func.func @transform_4(%arg0: i32, %arg1: i32) -> (i32, i32, i32) {
    %c0_i32 = arith.constant 0 : i32
    %c0_i32_0 = arith.constant 0 : i32
    return %c0_i32, %arg0, %arg1 : i32, i32, i32
  }
}

</mosaic_0001>

<llo_original>
// kernel: tpu_custom_call.1
$region0: #{tpu_custom_call.1}
  #allocation0 [shape = 'u32[]', space=smem, size = 0x4, offset = 0x4, fixed_abs, tag = 'smem constant byte address 0x4 - core index']
  #allocation1 [shape = 'u32[144,128]{1,0:T(1,128)}', space=vmem, size = 0x12000, scoped, tag = 'internal scratch']
  #allocation12 [shape = 's32[]', space=sflag, size = 0x4, offset = 0, fixed_abs, tag = 'sflag constant byte address 0x0 - dummy sync flag']
  %s0 = inlined_call_operand.hbm [shape: u8[128,768], index: 0, kind: input, shape index: {}]
  %s1 = inlined_call_operand.hbm [shape: bf16[384,384], index: 1, kind: input, shape index: {}]
  %s2 = inlined_call_operand.vmem [shape: f32[3], index: 2, kind: input, shape index: {}]
  %s3 = inlined_call_operand.vmem [shape: f32[3], index: 3, kind: input, shape index: {}]
  %s4 = inlined_call_operand.hbm [shape: f32[3,128,256], index: 4, kind: output, shape index: {}]
  %s5 = sld [smem:[#allocation0]]
  $region65: #{tpu_custom_call.1} parent=0
    _
  %s7 = ssub.s32 1, %s5
  %s8 = scalar_select 0, %s7, %s5
  $region1: #{tpu_custom_call.1} parent=0
    #allocation2 [shape = 'u8[49152]{0}', space=vmem, size = 0xc000, scoped, tag = 'input window, operand 0']
    #allocation3 [shape = 's32[2]{0}', space=sflag, size = 0x8, scoped, tag = 'scoped memory for tpu_custom_call.1']
    #allocation4 [shape = 's32[2]{0}', space=sflag, size = 0x8, scoped, tag = 'scoped memory for tpu_custom_call.1']
    #allocation5 [shape = 's32[2]{0}', space=sflag, size = 0x8, scoped, tag = 'scoped memory for tpu_custom_call.1']
    #allocation6 [shape = 'u8[294912]{0}', space=vmem, size = 0x48000, scoped, tag = 'input window, operand 1, single buffered']
    #allocation7 [shape = 's32[1]{0}', space=sflag, size = 0x4, scoped, tag = 'scoped memory for tpu_custom_call.1']
    #allocation8 [shape = 'u8[512]{0}', space=smem, size = 0x200, scoped, tag = 'input window, operand 2, single buffered']
    #allocation9 [shape = 'u8[512]{0}', space=smem, size = 0x200, scoped, tag = 'input window, operand 3, single buffered']
    #allocation10 [shape = 's32[1]{0}', space=sflag, size = 0x4, scoped, tag = 'scoped memory for tpu_custom_call.1']
    #allocation11 [shape = 'u8[196608]{0}', space=vmem, size = 0x30000, scoped, tag = 'output window, operand 0']
    %9 = vsyncpa [#allocation3], 0
    %s10 = scalar_lea.sflag [#allocation3], 1
    %11 = vsyncpa %s10, 0
    %12 = vsyncpa [#allocation7], 0
    %13 = vsyncpa [#allocation5], 0
    %14 = vsyncpa [#allocation10], 0
    %15 = vsyncpa [#allocation4], 0
    %s16 = scalar_lea.sflag [#allocation4], 1
    %17 = vsyncpa %s16, 0
    loop: start=0, step=1, limit=6
    $region2: #{tpu_custom_call.1} parent=1 // loop_pre_header
      _
    $region3: #{tpu_custom_call.1} parent=1 // loop_header
      %s19 = sphi 0, %s23
      %p20 = scmp.ge.s32.totalorder %s19, 6
      %s26 = sphi 0, %s38
      %s27 = sphi 0, %s34
      %s28 = sphi 0, %s26
      %s29 = sphi 0, %s27
      %s30 = sphi 0, %s28
      %s31 = sphi 0, %s29
      %s43 = sphi 0, %s45
      %s46 = sphi 0, %s43
      %s47 = sphi 0, %s46
      %s63 = sphi 0, %s47
      %s67 = sphi 0, %s67
      %s69 = sphi 0, %s67
      %s70 = sphi 0, %s69
      %s84 = sphi 0, %s70
      %s88 = sphi 0, %s88
      %s90 = sphi 0, %s88
      %s91 = sphi 0, %s90
      %s105 = sphi 0, %s91
      %s109 = sphi 0, %s109
      %s111 = sphi 0, %s109
      %s112 = sphi 0, %s111
      %s126 = sphi 0, %s112
      %s134 = sphi 0, %s136
      %s137 = sphi 0, %s134
      %s138 = sphi 0, %s137
      %s154 = sphi 0, %s138
    $region4: #{tpu_custom_call.1} parent=1 // loop_header_branch
      %22 = sbr.rel (%p20) target = $region8
    $region5: #{tpu_custom_call.1} parent=1 // loop_body
      %s24 = ssub.s32 %s19, 1
      %s25 = ssub.s32 %s19, 2
      %s32 = sadd.s32 1, %s27
      %p33 = scmp.ge.s32.totalorder %s32, 2
      %s34 = scalar_select %p33, 0, %s32
      %s35 = sadd.s32 1, %s26
      %s36 = scalar_select %p33, %s35, %s26
      %p37 = scmp.ge.s32.totalorder %s36, 2
      %s38 = scalar_select %p37, 0, %s36
      %s39 = ssub.s32 %s26, %s38
      %s40 = ssub.s32 %s27, %s34
      %s41 = sor.u32 %s39, %s40
      %p42 = scmp.eq.s32.totalorder %s41, 0
      %s44 = sadd.s32 %s43, 1
      %s45 = scalar_select %p42, %s43, %s44
      %p48 = pneg %p42
      %p49 = scmp.eq.s32.totalorder %s19, 3
      %p50 = por %p48, %p49
      %p51 = scmp.ne.s32.totalorder %s43, %s46
      %p52 = scmp.eq.s32.totalorder %s19, 0
      %p53 = por %p51, %p52
      %p54 = scmp.ne.s32.totalorder %s43, %s46
      %p55 = scmp.eq.s32.totalorder %s24, 3
      %p56 = por %p54, %p55
      %p57 = scmp.ne.s32.totalorder %s46, %s47
      %p58 = scmp.eq.s32.totalorder %s24, 0
      %p59 = por %p57, %p58
      %p60 = scmp.ne.s32.totalorder %s46, %s47
      %p61 = scmp.eq.s32.totalorder %s25, 3
      %p62 = por %p60, %p61
      %p64 = scmp.ne.s32.totalorder %s47, %s63
      %p65 = scmp.eq.s32.totalorder %s25, 0
      %p66 = por %p64, %p65
      %s68 = sadd.s32 %s67, 1
      %p71 = scmp.eq.s32.totalorder %s19, 3
      %p72 = scmp.ne.s32.totalorder %s67, %s69
      %p73 = scmp.eq.s32.totalorder %s19, 0
      %p74 = por %p72, %p73
      %p75 = scmp.ne.s32.totalorder %s67, %s69
      %p76 = scmp.eq.s32.totalorder %s24, 3
      %p77 = por %p75, %p76
      %p78 = scmp.ne.s32.totalorder %s69, %s70
      %p79 = scmp.eq.s32.totalorder %s24, 0
      %p80 = por %p78, %p79
      %p81 = scmp.ne.s32.totalorder %s69, %s70
      %p82 = scmp.eq.s32.totalorder %s25, 3
      %p83 = por %p81, %p82
      %p85 = scmp.ne.s32.totalorder %s70, %s84
      %p86 = scmp.eq.s32.totalorder %s25, 0
      %p87 = por %p85, %p86
      %s89 = sadd.s32 %s88, 1
      %p92 = scmp.eq.s32.totalorder %s19, 3
      %p93 = scmp.ne.s32.totalorder %s88, %s90
      %p94 = scmp.eq.s32.totalorder %s19, 0
      %p95 = por %p93, %p94
      %p96 = scmp.ne.s32.totalorder %s88, %s90
      %p97 = scmp.eq.s32.totalorder %s24, 3
      %p98 = por %p96, %p97
      %p99 = scmp.ne.s32.totalorder %s90, %s91
      %p100 = scmp.eq.s32.totalorder %s24, 0
      %p101 = por %p99, %p100
      %p102 = scmp.ne.s32.totalorder %s90, %s91
      %p103 = scmp.eq.s32.totalorder %s25, 3
      %p104 = por %p102, %p103
      %p106 = scmp.ne.s32.totalorder %s91, %s105
      %p107 = scmp.eq.s32.totalorder %s25, 0
      %p108 = por %p106, %p107
      %s110 = sadd.s32 %s109, 1
      %p113 = scmp.eq.s32.totalorder %s19, 3
      %p114 = scmp.ne.s32.totalorder %s109, %s111
      %p115 = scmp.eq.s32.totalorder %s19, 0
      %p116 = por %p114, %p115
      %p117 = scmp.ne.s32.totalorder %s109, %s111
      %p118 = scmp.eq.s32.totalorder %s24, 3
      %p119 = por %p117, %p118
      %p120 = scmp.ne.s32.totalorder %s111, %s112
      %p121 = scmp.eq.s32.totalorder %s24, 0
      %p122 = por %p120, %p121
      %p123 = scmp.ne.s32.totalorder %s111, %s112
      %p124 = scmp.eq.s32.totalorder %s25, 3
      %p125 = por %p123, %p124
      %p127 = scmp.ne.s32.totalorder %s112, %s126
      %p128 = scmp.eq.s32.totalorder %s25, 0
      %p129 = por %p127, %p128
      %s130 = ssub.s32 %s26, %s38
      %s131 = ssub.s32 %s27, %s34
      %s132 = sor.u32 %s130, %s131
      %p133 = scmp.eq.s32.totalorder %s132, 0
      %s135 = sadd.s32 %s134, 1
      %s136 = scalar_select %p133, %s134, %s135
      %p139 = pneg %p133
      %p140 = scmp.eq.s32.totalorder %s19, 3
      %p141 = por %p139, %p140
      %p142 = scmp.ne.s32.totalorder %s134, %s137
      %p143 = scmp.eq.s32.totalorder %s19, 0
      %p144 = por %p142, %p143
      %p145 = scmp.ne.s32.totalorder %s134, %s137
      %p146 = scmp.eq.s32.totalorder %s24, 3
      %p147 = por %p145, %p146
      %p148 = scmp.ne.s32.totalorder %s137, %s138
      %p149 = scmp.eq.s32.totalorder %s24, 0
      %p150 = por %p148, %p149
      %p151 = scmp.ne.s32.totalorder %s137, %s138
      %p152 = scmp.eq.s32.totalorder %s25, 3
      %p153 = por %p151, %p152
      %p155 = scmp.ne.s32.totalorder %s138, %s154
      %p156 = scmp.eq.s32.totalorder %s25, 0
      %p157 = por %p155, %p156
      %p158 = scmp.le.s32.totalorder 1, %s19
      %p159 = scmp.lt.s32.totalorder %s19, 5
      %p160 = pnand %p158, %p159
      %p161 = pneg %p160
      // Predicated region
      $region9: #{tpu_custom_call.1} parent=5 // pred_check
        _
      $region10: #{tpu_custom_call.1} parent=5 // pred_check_branch
        %163 = sbr.rel (%p160) target = $region12
      $region11: #{tpu_custom_call.1} parent=5 // pred_region
        %s164 = ssub.s32 %s19, 1
        // Predicated region
        $region13: #{tpu_custom_call.1} parent=11 // pred_check
          %p165 = pneg %p80
        $region14: #{tpu_custom_call.1} parent=11 // pred_check_branch
          %167 = sbr.rel (%p165) target = $region16
        $region15: #{tpu_custom_call.1} parent=11 // pred_region
          %s169 = ssub.s32 9216, 9216
          %170 = vsyncadd [#allocation7], %s169
          %s171 = sshll.u32 [#allocation6], 4
          %s172 = int_to_ptr.vmem [resolvable:$true] %s171
          %177 = dma.hbm_to_vmem [thread:$0]  %s1, 9216, %s172, [#allocation7], 192, 192, 12
        $region16: #{tpu_custom_call.1} parent=11 // pred_fallthru
          _
        // Predicated region
        $region17: #{tpu_custom_call.1} parent=11 // pred_check
          %p178 = pneg %p101
        $region18: #{tpu_custom_call.1} parent=11 // pred_check_branch
          %180 = sbr.rel (%p178) target = $region20
        $region19: #{tpu_custom_call.1} parent=11 // pred_region
          %s182 = ssub.s32 16, 16
          %183 = vsyncadd [#allocation5], %s182
          %s185 = sshll.u32 %s2, 4
          %s186 = int_to_ptr.vmem [resolvable:$true] %s185
          %188 = dma.vmem_to_smem %s186, 16, [#allocation8], [#allocation5]
        $region20: #{tpu_custom_call.1} parent=11 // pred_fallthru
          _
        // Predicated region
        $region21: #{tpu_custom_call.1} parent=11 // pred_check
          %p189 = pneg %p122
        $region22: #{tpu_custom_call.1} parent=11 // pred_check_branch
          %191 = sbr.rel (%p189) target = $region24
        $region23: #{tpu_custom_call.1} parent=11 // pred_region
          %s193 = ssub.s32 16, 16
          %194 = vsyncadd [#allocation10], %s193
          %s196 = sshll.u32 %s3, 4
          %s197 = int_to_ptr.vmem [resolvable:$true] %s196
          %199 = dma.vmem_to_smem %s197, 16, [#allocation9], [#allocation10]
        $region24: #{tpu_custom_call.1} parent=11 // pred_fallthru
          _
      $region12: #{tpu_custom_call.1} parent=5 // pred_fallthru
        _
      %p200 = scmp.lt.s32.totalorder %s19, 4
      // Predicated region
      $region25: #{tpu_custom_call.1} parent=5 // pred_check
        %p201 = pneg %p200
      $region26: #{tpu_custom_call.1} parent=5 // pred_check_branch
        %203 = sbr.rel (%p201) target = $region28
      $region27: #{tpu_custom_call.1} parent=5 // pred_region
        // Predicated region
        $region29: #{tpu_custom_call.1} parent=27 // pred_check
          %p204 = pneg %p53
        $region30: #{tpu_custom_call.1} parent=27 // pred_check_branch
          %206 = sbr.rel (%p204) target = $region32
        $region31: #{tpu_custom_call.1} parent=27 // pred_region
          %s207 = sand.u32 %s43, 1
          %s208 = scalar_lea.sflag [#allocation3], %s207
          %s209 = sand.u32 %s43, 1
          %s210 = smul.addr %s209, 48
          %s211 = scalar_lea.vmem [#allocation2], %s210
          %s212 = smul.u32 2, %s26
          %s213 = smul.u32 3, %s27
          %s215 = ssub.s32 768, 768
          %216 = vsyncadd %s208, %s215
          %s217 = smul.addr %s212, 6
          %s218 = sadd.s32 %s213, %s217
          %s219 = smul.addr %s218, 128
          %s220 = scalar_lea.hbm %s0, %s219
          %s221 = sshll.u32 %s211, 4
          %s222 = int_to_ptr.vmem [resolvable:$true] %s221
          %227 = dma.hbm_to_vmem [thread:$0]  %s220, 768, %s222, %s208, 768, 384, 24
        $region32: #{tpu_custom_call.1} parent=27 // pred_fallthru
          _
      $region28: #{tpu_custom_call.1} parent=5 // pred_fallthru
        _
      %p228 = scmp.le.s32.totalorder 1, %s19
      %p229 = scmp.lt.s32.totalorder %s19, 5
      %p230 = pnand %p228, %p229
      %p231 = pneg %p230
      // Predicated region
      $region33: #{tpu_custom_call.1} parent=5 // pred_check
        _
      $region34: #{tpu_custom_call.1} parent=5 // pred_check_branch
        %233 = sbr.rel (%p230) target = $region36
      $region35: #{tpu_custom_call.1} parent=5 // pred_region
        %s234 = ssub.s32 %s19, 1
        %s235 = sand.u32 %s46, 1
        %s236 = scalar_lea.sflag [#allocation3], %s235
        %s237 = sand.u32 %s46, 1
        %s238 = smul.addr %s237, 48
        %s239 = scalar_lea.vmem [#allocation2], %s238
        // Predicated region
        $region37: #{tpu_custom_call.1} parent=35 // pred_check
          %p240 = pneg %p59
        $region38: #{tpu_custom_call.1} parent=35 // pred_check_branch
          %242 = sbr.rel (%p240) target = $region40
        $region39: #{tpu_custom_call.1} parent=35 // pred_region
          %243 = dma.done %s236, 768
        $region40: #{tpu_custom_call.1} parent=35 // pred_fallthru
          _
        // Predicated region
        $region41: #{tpu_custom_call.1} parent=35 // pred_check
          %p244 = pneg %p80
        $region42: #{tpu_custom_call.1} parent=35 // pred_check_branch
          %246 = sbr.rel (%p244) target = $region44
        $region43: #{tpu_custom_call.1} parent=35 // pred_region
          %247 = dma.done [#allocation7], 9216
        $region44: #{tpu_custom_call.1} parent=35 // pred_fallthru
          _
        // Predicated region
        $region45: #{tpu_custom_call.1} parent=35 // pred_check
          %p248 = pneg %p101
        $region46: #{tpu_custom_call.1} parent=35 // pred_check_branch
          %250 = sbr.rel (%p248) target = $region48
        $region47: #{tpu_custom_call.1} parent=35 // pred_region
          %251 = dma.done [#allocation5], 16
        $region48: #{tpu_custom_call.1} parent=35 // pred_fallthru
          _
        // Predicated region
        $region49: #{tpu_custom_call.1} parent=35 // pred_check
          %p252 = pneg %p122
        $region50: #{tpu_custom_call.1} parent=35 // pred_check_branch
          %254 = sbr.rel (%p252) target = $region52
        $region51: #{tpu_custom_call.1} parent=35 // pred_region
          %255 = dma.done [#allocation10], 16
        $region52: #{tpu_custom_call.1} parent=35 // pred_fallthru
          _
        %256 = sfence
        %s257 = sand.u32 %s46, 1
        %s258 = scalar_lea.sflag [#allocation3], %s257
        %s259 = sand.u32 %s46, 1
        %s260 = smul.addr %s259, 48
        %s261 = scalar_lea.vmem [#allocation2], %s260
        %p262 = pneg %p59
        %p263 = pneg %p56
        %p264 = pneg %p80
        %p265 = pneg %p77
        %p266 = pneg %p101
        %p267 = pneg %p98
        %p268 = pneg %p122
        %p269 = pneg %p119
        %p270 = pneg %p150
        %p271 = pneg %p147
        %s272 = sand.u32 %s137, 1
        %s273 = scalar_lea.sflag [#allocation4], %s272
        %s274 = sand.u32 %s137, 1
        %s275 = smul.addr %s274, 192
        %s276 = scalar_lea.vmem [#allocation11], %s275
        %s277 = smul.u32 2, %s28
        %s278 = smul.u32 3, %s29
        %s279 = smul.u32 8, %s28
        %v281 = vld [vmem:[%s239] sm:$0xff]
        %v282 = vld [vmem:[%s239 + $0x8] sm:$0xff]
        %v283 = vld [vmem:[%s239 + $0x10] sm:$0xff]
        %v284 = vld [vmem:[%s239 + $0x18] sm:$0xff]
        %v285 = vld [vmem:[%s239 + $0x20] sm:$0xff]
        %v286 = vld [vmem:[%s239 + $0x28] sm:$0xff]
        %v287 = vunpack.c.l.u8.bf16 %v281
        %v288 = vunpack.c.l.u8.bf16 %v282
        %v289 = vunpack.c.l.u8.bf16 %v283
        %v290 = vunpack.c.h.u8.bf16 %v281
        %v291 = vunpack.c.h.u8.bf16 %v282
        %v292 = vunpack.c.h.u8.bf16 %v283
        %v293 = vunpack.c.l.u8.bf16 %v284
        %v294 = vunpack.c.l.u8.bf16 %v285
        %v295 = vunpack.c.l.u8.bf16 %v286
        %v296 = vunpack.c.h.u8.bf16 %v284
        %v297 = vunpack.c.h.u8.bf16 %v285
        %v298 = vunpack.c.h.u8.bf16 %v286
        %v299 = vld [vmem:[#allocation6] sm:$0xff]
        %v300 = vld [vmem:[#allocation6 + $0x8] sm:$0xf]
        %v301 = vld [vmem:[#allocation6 + $0xc] sm:$0xff]
        %v302 = vld [vmem:[#allocation6 + $0x14] sm:$0xf]
        %v303 = vld [vmem:[#allocation6 + $0x18] sm:$0xff]
        %v304 = vld [vmem:[#allocation6 + $0x20] sm:$0xf]
        %v305 = vld [vmem:[#allocation6 + $0x24] sm:$0xff]
        %v306 = vld [vmem:[#allocation6 + $0x2c] sm:$0xf]
        %v307 = vld [vmem:[#allocation6 + $0x30] sm:$0xff]
        %v308 = vld [vmem:[#allocation6 + $0x38] sm:$0xf]
        %v309 = vld [vmem:[#allocation6 + $0x3c] sm:$0xff]
        %v310 = vld [vmem:[#allocation6 + $0x44] sm:$0xf]
        %v311 = vld [vmem:[#allocation6 + $0x48] sm:$0xff]
        %v312 = vld [vmem:[#allocation6 + $0x50] sm:$0xf]
        %v313 = vld [vmem:[#allocation6 + $0x54] sm:$0xff]
        %v314 = vld [vmem:[#allocation6 + $0x5c] sm:$0xf]
        %v315 = vld [vmem:[#allocation6 + $0x60] sm:$0xff]
        %v316 = vld [vmem:[#allocation6 + $0x68] sm:$0xf]
        %v317 = vld [vmem:[#allocation6 + $0x6c] sm:$0xff]
        %v318 = vld [vmem:[#allocation6 + $0x74] sm:$0xf]
        %v319 = vld [vmem:[#allocation6 + $0x78] sm:$0xff]
        %v320 = vld [vmem:[#allocation6 + $0x80] sm:$0xf]
        %v321 = vld [vmem:[#allocation6 + $0x84] sm:$0xff]
        %v322 = vld [vmem:[#allocation6 + $0x8c] sm:$0xf]
        %v323 = vld [vmem:[#allocation6 + $0x90] sm:$0xff]
        %v324 = vld [vmem:[#allocation6 + $0x98] sm:$0xf]
        %v325 = vld [vmem:[#allocation6 + $0x9c] sm:$0xff]
        %v326 = vld [vmem:[#allocation6 + $0xa4] sm:$0xf]
        %v327 = vld [vmem:[#allocation6 + $0xa8] sm:$0xff]
        %v328 = vld [vmem:[#allocation6 + $0xb0] sm:$0xf]
        %v329 = vld [vmem:[#allocation6 + $0xb4] sm:$0xff]
        %v330 = vld [vmem:[#allocation6 + $0xbc] sm:$0xf]
        %v331 = vld [vmem:[#allocation6 + $0xc0] sm:$0xff]
        %v332 = vld [vmem:[#allocation6 + $0xc8] sm:$0xf]
        %v333 = vld [vmem:[#allocation6 + $0xcc] sm:$0xff]
        %v334 = vld [vmem:[#allocation6 + $0xd4] sm:$0xf]
        %v335 = vld [vmem:[#allocation6 + $0xd8] sm:$0xff]
        %v336 = vld [vmem:[#allocation6 + $0xe0] sm:$0xf]
        %v337 = vld [vmem:[#allocation6 + $0xe4] sm:$0xff]
        %v338 = vld [vmem:[#allocation6 + $0xec] sm:$0xf]
        %v339 = vld [vmem:[#allocation6 + $0xf0] sm:$0xff]
        %v340 = vld [vmem:[#allocation6 + $0xf8] sm:$0xf]
        %v341 = vld [vmem:[#allocation6 + $0xfc] sm:$0xff]
        %v342 = vld [vmem:[#allocation6 + $0x104] sm:$0xf]
        %v343 = vld [vmem:[#allocation6 + $0x108] sm:$0xff]
        %v344 = vld [vmem:[#allocation6 + $0x110] sm:$0xf]
        %v345 = vld [vmem:[#allocation6 + $0x114] sm:$0xff]
        %v346 = vld [vmem:[#allocation6 + $0x11c] sm:$0xf]
        %v347 = vld [vmem:[#allocation6 + $0x120] sm:$0xff]
        %v348 = vld [vmem:[#allocation6 + $0x128] sm:$0xf]
        %v349 = vld [vmem:[#allocation6 + $0x12c] sm:$0xff]
        %v350 = vld [vmem:[#allocation6 + $0x134] sm:$0xf]
        %v351 = vld [vmem:[#allocation6 + $0x138] sm:$0xff]
        %v352 = vld [vmem:[#allocation6 + $0x140] sm:$0xf]
        %v353 = vld [vmem:[#allocation6 + $0x144] sm:$0xff]
        %v354 = vld [vmem:[#allocation6 + $0x14c] sm:$0xf]
        %v355 = vld [vmem:[#allocation6 + $0x150] sm:$0xff]
        %v356 = vld [vmem:[#allocation6 + $0x158] sm:$0xf]
        %v357 = vld [vmem:[#allocation6 + $0x15c] sm:$0xff]
        %v358 = vld [vmem:[#allocation6 + $0x164] sm:$0xf]
        %v359 = vld [vmem:[#allocation6 + $0x168] sm:$0xff]
        %v360 = vld [vmem:[#allocation6 + $0x170] sm:$0xf]
        %v361 = vld [vmem:[#allocation6 + $0x174] sm:$0xff]
        %v362 = vld [vmem:[#allocation6 + $0x17c] sm:$0xf]
        %v363 = vld [vmem:[#allocation6 + $0x180] sm:$0xff]
        %v364 = vld [vmem:[#allocation6 + $0x188] sm:$0xf]
        %v365 = vld [vmem:[#allocation6 + $0x18c] sm:$0xff]
        %v366 = vld [vmem:[#allocation6 + $0x194] sm:$0xf]
        %v367 = vld [vmem:[#allocation6 + $0x198] sm:$0xff]
        %v368 = vld [vmem:[#allocation6 + $0x1a0] sm:$0xf]
        %v369 = vld [vmem:[#allocation6 + $0x1a4] sm:$0xff]
        %v370 = vld [vmem:[#allocation6 + $0x1ac] sm:$0xf]
        %v371 = vld [vmem:[#allocation6 + $0x1b0] sm:$0xff]
        %v372 = vld [vmem:[#allocation6 + $0x1b8] sm:$0xf]
        %v373 = vld [vmem:[#allocation6 + $0x1bc] sm:$0xff]
        %v374 = vld [vmem:[#allocation6 + $0x1c4] sm:$0xf]
        %v375 = vld [vmem:[#allocation6 + $0x1c8] sm:$0xff]
        %v376 = vld [vmem:[#allocation6 + $0x1d0] sm:$0xf]
        %v377 = vld [vmem:[#allocation6 + $0x1d4] sm:$0xff]
        %v378 = vld [vmem:[#allocation6 + $0x1dc] sm:$0xf]
        %v379 = vld [vmem:[#allocation6 + $0x1e0] sm:$0xff]
        %v380 = vld [vmem:[#allocation6 + $0x1e8] sm:$0xf]
        %v381 = vld [vmem:[#allocation6 + $0x1ec] sm:$0xff]
        %v382 = vld [vmem:[#allocation6 + $0x1f4] sm:$0xf]
        %v383 = vld [vmem:[#allocation6 + $0x1f8] sm:$0xff]
        %v384 = vld [vmem:[#allocation6 + $0x200] sm:$0xf]
        %v385 = vld [vmem:[#allocation6 + $0x204] sm:$0xff]
        %v386 = vld [vmem:[#allocation6 + $0x20c] sm:$0xf]
        %v387 = vld [vmem:[#allocation6 + $0x210] sm:$0xff]
        %v388 = vld [vmem:[#allocation6 + $0x218] sm:$0xf]
        %v389 = vld [vmem:[#allocation6 + $0x21c] sm:$0xff]
        %v390 = vld [vmem:[#allocation6 + $0x224] sm:$0xf]
        %v391 = vld [vmem:[#allocation6 + $0x228] sm:$0xff]
        %v392 = vld [vmem:[#allocation6 + $0x230] sm:$0xf]
        %v393 = vld [vmem:[#allocation6 + $0x234] sm:$0xff]
        %v394 = vld [vmem:[#allocation6 + $0x23c] sm:$0xf]
        %v491 = vunpack.c.l.b16 %v299
        %v492 = vunpack.c.h.b16 %v299
        %v493 = vunpack.c.l.b16 %v300
        %v494 = vunpack.c.l.b16 %v301
        %v495 = vunpack.c.h.b16 %v301
        %v496 = vunpack.c.l.b16 %v302
        %v497 = vunpack.c.l.b16 %v303
        %v498 = vunpack.c.h.b16 %v303
        %v499 = vunpack.c.l.b16 %v304
        %v500 = vunpack.c.l.b16 %v305
        %v501 = vunpack.c.h.b16 %v305
        %v502 = vunpack.c.l.b16 %v306
        %v503 = vunpack.c.l.b16 %v307
        %v504 = vunpack.c.h.b16 %v307
        %v505 = vunpack.c.l.b16 %v308
        %v506 = vunpack.c.l.b16 %v309
        %v507 = vunpack.c.h.b16 %v309
        %v508 = vunpack.c.l.b16 %v310
        %v509 = vunpack.c.l.b16 %v311
        %v510 = vunpack.c.h.b16 %v311
        %v511 = vunpack.c.l.b16 %v312
        %v512 = vunpack.c.l.b16 %v313
        %v513 = vunpack.c.h.b16 %v313
        %v514 = vunpack.c.l.b16 %v314
        %v515 = vunpack.c.l.b16 %v315
        %v516 = vunpack.c.h.b16 %v315
        %v517 = vunpack.c.l.b16 %v316
        %v518 = vunpack.c.l.b16 %v317
        %v519 = vunpack.c.h.b16 %v317
        %v520 = vunpack.c.l.b16 %v318
        %v521 = vunpack.c.l.b16 %v319
        %v522 = vunpack.c.h.b16 %v319
        %v523 = vunpack.c.l.b16 %v320
        %v524 = vunpack.c.l.b16 %v321
        %v525 = vunpack.c.h.b16 %v321
        %v526 = vunpack.c.l.b16 %v322
        %v527 = vunpack.c.l.b16 %v323
        %v528 = vunpack.c.h.b16 %v323
        %v529 = vunpack.c.l.b16 %v324
        %v530 = vunpack.c.l.b16 %v325
        %v531 = vunpack.c.h.b16 %v325
        %v532 = vunpack.c.l.b16 %v326
        %v533 = vunpack.c.l.b16 %v327
        %v534 = vunpack.c.h.b16 %v327
        %v535 = vunpack.c.l.b16 %v328
        %v536 = vunpack.c.l.b16 %v329
        %v537 = vunpack.c.h.b16 %v329
        %v538 = vunpack.c.l.b16 %v330
        %v539 = vunpack.c.l.b16 %v331
        %v540 = vunpack.c.h.b16 %v331
        %v541 = vunpack.c.l.b16 %v332
        %v542 = vunpack.c.l.b16 %v333
        %v543 = vunpack.c.h.b16 %v333
        %v544 = vunpack.c.l.b16 %v334
        %v545 = vunpack.c.l.b16 %v335
        %v546 = vunpack.c.h.b16 %v335
        %v547 = vunpack.c.l.b16 %v336
        %v548 = vunpack.c.l.b16 %v337
        %v549 = vunpack.c.h.b16 %v337
        %v550 = vunpack.c.l.b16 %v338
        %v551 = vunpack.c.l.b16 %v339
        %v552 = vunpack.c.h.b16 %v339
        %v553 = vunpack.c.l.b16 %v340
        %v554 = vunpack.c.l.b16 %v341
        %v555 = vunpack.c.h.b16 %v341
        %v556 = vunpack.c.l.b16 %v342
        %v557 = vunpack.c.l.b16 %v343
        %v558 = vunpack.c.h.b16 %v343
        %v559 = vunpack.c.l.b16 %v344
        %v560 = vunpack.c.l.b16 %v345
        %v561 = vunpack.c.h.b16 %v345
        %v562 = vunpack.c.l.b16 %v346
        %v563 = vunpack.c.l.b16 %v347
        %v564 = vunpack.c.h.b16 %v347
        %v565 = vunpack.c.l.b16 %v348
        %v566 = vunpack.c.l.b16 %v349
        %v567 = vunpack.c.h.b16 %v349
        %v568 = vunpack.c.l.b16 %v350
        %v569 = vunpack.c.l.b16 %v351
        %v570 = vunpack.c.h.b16 %v351
        %v571 = vunpack.c.l.b16 %v352
        %v572 = vunpack.c.l.b16 %v353
        %v573 = vunpack.c.h.b16 %v353
        %v574 = vunpack.c.l.b16 %v354
        %v575 = vunpack.c.l.b16 %v355
        %v576 = vunpack.c.h.b16 %v355
        %v577 = vunpack.c.l.b16 %v356
        %v578 = vunpack.c.l.b16 %v357
        %v579 = vunpack.c.h.b16 %v357
        %v580 = vunpack.c.l.b16 %v358
        %v581 = vunpack.c.l.b16 %v359
        %v582 = vunpack.c.h.b16 %v359
        %v583 = vunpack.c.l.b16 %v360
        %v584 = vunpack.c.l.b16 %v361
        %v585 = vunpack.c.h.b16 %v361
        %v586 = vunpack.c.l.b16 %v362
        %v587 = vunpack.c.l.b16 %v363
        %v588 = vunpack.c.h.b16 %v363
        %v589 = vunpack.c.l.b16 %v364
        %v590 = vunpack.c.l.b16 %v365
        %v591 = vunpack.c.h.b16 %v365
        %v592 = vunpack.c.l.b16 %v366
        %v593 = vunpack.c.l.b16 %v367
        %v594 = vunpack.c.h.b16 %v367
        %v595 = vunpack.c.l.b16 %v368
        %v596 = vunpack.c.l.b16 %v369
        %v597 = vunpack.c.h.b16 %v369
        %v598 = vunpack.c.l.b16 %v370
        %v599 = vunpack.c.l.b16 %v371
        %v600 = vunpack.c.h.b16 %v371
        %v601 = vunpack.c.l.b16 %v372
        %v602 = vunpack.c.l.b16 %v373
        %v603 = vunpack.c.h.b16 %v373
        %v604 = vunpack.c.l.b16 %v374
        %v605 = vunpack.c.l.b16 %v375
        %v606 = vunpack.c.h.b16 %v375
        %v607 = vunpack.c.l.b16 %v376
        %v608 = vunpack.c.l.b16 %v377
        %v609 = vunpack.c.h.b16 %v377
        %v610 = vunpack.c.l.b16 %v378
        %v611 = vunpack.c.l.b16 %v379
        %v612 = vunpack.c.h.b16 %v379
        %v613 = vunpack.c.l.b16 %v380
        %v614 = vunpack.c.l.b16 %v381
        %v615 = vunpack.c.h.b16 %v381
        %v616 = vunpack.c.l.b16 %v382
        %v617 = vunpack.c.l.b16 %v383
        %v618 = vunpack.c.h.b16 %v383
        %v619 = vunpack.c.l.b16 %v384
        %v620 = vunpack.c.l.b16 %v385
        %v621 = vunpack.c.h.b16 %v385
        %v622 = vunpack.c.l.b16 %v386
        %v623 = vunpack.c.l.b16 %v387
        %v624 = vunpack.c.h.b16 %v387
        %v625 = vunpack.c.l.b16 %v388
        %v626 = vunpack.c.l.b16 %v389
        %v627 = vunpack.c.h.b16 %v389
        %v628 = vunpack.c.l.b16 %v390
        %v629 = vunpack.c.l.b16 %v391
        %v630 = vunpack.c.h.b16 %v391
        %v631 = vunpack.c.l.b16 %v392
        %v632 = vunpack.c.l.b16 %v393
        %v633 = vunpack.c.h.b16 %v393
        %v634 = vunpack.c.l.b16 %v394
        %v635 = vpack.c.b16 %v494, %v491
        %v636 = vpack.c.b16 %v495, %v492
        %v637 = vpack.c.b16 %v496, %v493
        %v638 = vpack.c.b16 %v500, %v497
        %v639 = vpack.c.b16 %v501, %v498
        %v640 = vpack.c.b16 %v502, %v499
        %v641 = vpack.c.b16 %v506, %v503
        %v642 = vpack.c.b16 %v507, %v504
        %v643 = vpack.c.b16 %v508, %v505
        %v644 = vpack.c.b16 %v512, %v509
        %v645 = vpack.c.b16 %v513, %v510
        %v646 = vpack.c.b16 %v514, %v511
        %v647 = vpack.c.b16 %v518, %v515
        %v648 = vpack.c.b16 %v519, %v516
        %v649 = vpack.c.b16 %v520, %v517
        %v650 = vpack.c.b16 %v524, %v521
        %v651 = vpack.c.b16 %v525, %v522
        %v652 = vpack.c.b16 %v526, %v523
        %v653 = vpack.c.b16 %v530, %v527
        %v654 = vpack.c.b16 %v531, %v528
        %v655 = vpack.c.b16 %v532, %v529
        %v656 = vpack.c.b16 %v536, %v533
        %v657 = vpack.c.b16 %v537, %v534
        %v658 = vpack.c.b16 %v538, %v535
        %v659 = vpack.c.b16 %v542, %v539
        %v660 = vpack.c.b16 %v543, %v540
        %v661 = vpack.c.b16 %v544, %v541
        %v662 = vpack.c.b16 %v548, %v545
        %v663 = vpack.c.b16 %v549, %v546
        %v664 = vpack.c.b16 %v550, %v547
        %v665 = vpack.c.b16 %v554, %v551
        %v666 = vpack.c.b16 %v555, %v552
        %v667 = vpack.c.b16 %v556, %v553
        %v668 = vpack.c.b16 %v560, %v557
        %v669 = vpack.c.b16 %v561, %v558
        %v670 = vpack.c.b16 %v562, %v559
        %v671 = vpack.c.b16 %v566, %v563
        %v672 = vpack.c.b16 %v567, %v564
        %v673 = vpack.c.b16 %v568, %v565
        %v674 = vpack.c.b16 %v572, %v569
        %v675 = vpack.c.b16 %v573, %v570
        %v676 = vpack.c.b16 %v574, %v571
        %v677 = vpack.c.b16 %v578, %v575
        %v678 = vpack.c.b16 %v579, %v576
        %v679 = vpack.c.b16 %v580, %v577
        %v680 = vpack.c.b16 %v584, %v581
        %v681 = vpack.c.b16 %v585, %v582
        %v682 = vpack.c.b16 %v586, %v583
        %v683 = vpack.c.b16 %v590, %v587
        %v684 = vpack.c.b16 %v591, %v588
        %v685 = vpack.c.b16 %v592, %v589
        %v686 = vpack.c.b16 %v596, %v593
        %v687 = vpack.c.b16 %v597, %v594
        %v688 = vpack.c.b16 %v598, %v595
        %v689 = vpack.c.b16 %v602, %v599
        %v690 = vpack.c.b16 %v603, %v600
        %v691 = vpack.c.b16 %v604, %v601
        %v692 = vpack.c.b16 %v608, %v605
        %v693 = vpack.c.b16 %v609, %v606
        %v694 = vpack.c.b16 %v610, %v607
        %v695 = vpack.c.b16 %v614, %v611
        %v696 = vpack.c.b16 %v615, %v612
        %v697 = vpack.c.b16 %v616, %v613
        %v698 = vpack.c.b16 %v620, %v617
        %v699 = vpack.c.b16 %v621, %v618
        %v700 = vpack.c.b16 %v622, %v619
        %v701 = vpack.c.b16 %v626, %v623
        %v702 = vpack.c.b16 %v627, %v624
        %v703 = vpack.c.b16 %v628, %v625
        %v704 = vpack.c.b16 %v632, %v629
        %v705 = vpack.c.b16 %v633, %v630
        %v706 = vpack.c.b16 %v634, %v631
        %779 = vmatprep.subr.bf16.mxu0 %v636
        %780 = vmatpush1.bf16.msra.mxu0 %v635
        %781 = vmatprep.subr.bf16.mxu0 %v639
        %782 = vmatpush1.bf16.msra.mxu0 %v638
        %783 = vmatprep.subr.bf16.mxu0 %v642
        %784 = vmatpush1.bf16.msra.mxu0 %v641
        %785 = vmatprep.subr.bf16.mxu0 %v645
        %786 = vmatpush1.bf16.msra.mxu0 %v644
        %787 = vmatprep.subr.bf16.mxu0 %v648
        %788 = vmatpush1.bf16.msra.mxu0 %v647
        %789 = vmatprep.subr.bf16.mxu0 %v651
        %790 = vmatpush1.bf16.msra.mxu0 %v650
        %791 = vmatprep.subr.bf16.mxu0 %v654
        %792 = vmatpush1.bf16.msra.mxu0 %v653
        %793 = vmatprep.subr.bf16.mxu0 %v657
        %794 = vmatpush1.bf16.msra.mxu0 %v656
        %795 = vmatprep.subr.bf16.mxu0 %v660
        %796 = vmatpush1.bf16.msra.mxu0 %v659
        %797 = vmatprep.subr.bf16.mxu0 %v663
        %798 = vmatpush1.bf16.msra.mxu0 %v662
        %799 = vmatprep.subr.bf16.mxu0 %v666
        %800 = vmatpush1.bf16.msra.mxu0 %v665
        %801 = vmatprep.subr.bf16.mxu0 %v669
        %802 = vmatpush1.bf16.msra.mxu0 %v668
        %803 = vmatprep.subr.bf16.mxu0 %v672
        %804 = vmatpush1.bf16.msra.mxu0 %v671
        %805 = vmatprep.subr.bf16.mxu0 %v675
        %806 = vmatpush1.bf16.msra.mxu0 %v674
        %807 = vmatprep.subr.bf16.mxu0 %v678
        %808 = vmatpush1.bf16.msra.mxu0 %v677
        %809 = vmatprep.subr.bf16.mxu0 %v681
        %810 = vmatpush1.bf16.msra.mxu0 %v680
        %811 = vmatprep.mubr.bf16.mxu0 %v288
        %812 = vmatmul.mubr.bf16.gmra.mrb[0].mxu0 %v287
        %v813 = vpop.f32.mrb[0].mxu0
        %v814 = vadd.f32 0.0, %v813
        %v815 = vpop.f32.mrb[0].mxu0
        %v816 = vadd.f32 0.0, %v815
        %v817 = vpop.f32.mrb[0].mxu0
        %v818 = vadd.f32 0.0, %v817
        %v819 = vpop.f32.mrb[0].mxu0
        %v820 = vadd.f32 0.0, %v819
        %821 = vmatprep.mubr.bf16.mxu0 %v291
        %822 = vmatmul.mubr.bf16.gmra.mrb[0].mxu0 %v290
        %v823 = vpop.f32.mrb[0].mxu0
        %v824 = vadd.f32 0.0, %v823
        %v825 = vpop.f32.mrb[0].mxu0
        %v826 = vadd.f32 0.0, %v825
        %v827 = vpop.f32.mrb[0].mxu0
        %v828 = vadd.f32 0.0, %v827
        %v829 = vpop.f32.mrb[0].mxu0
        %v830 = vadd.f32 0.0, %v829
        %831 = vmatprep.mubr.bf16.mxu0 %v294
        %832 = vmatmul.mubr.bf16.gmra.mrb[0].mxu0 %v293
        %v833 = vpop.f32.mrb[0].mxu0
        %v834 = vadd.f32 0.0, %v833
        %v835 = vpop.f32.mrb[0].mxu0
        %v836 = vadd.f32 0.0, %v835
        %v837 = vpop.f32.mrb[0].mxu0
        %v838 = vadd.f32 0.0, %v837
        %v839 = vpop.f32.mrb[0].mxu0
        %v840 = vadd.f32 0.0, %v839
        %841 = vmatprep.mubr.bf16.mxu0 %v297
        %842 = vmatmul.mubr.bf16.gmra.mrb[0].mxu0 %v296
        %v843 = vpop.f32.mrb[0].mxu0
        %v844 = vadd.f32 0.0, %v843
        %v845 = vpop.f32.mrb[0].mxu0
        %v846 = vadd.f32 0.0, %v845
        %v847 = vpop.f32.mrb[0].mxu0
        %v848 = vadd.f32 0.0, %v847
        %v849 = vpop.f32.mrb[0].mxu0
        %v850 = vadd.f32 0.0, %v849
        %851 = vdwg.mxu0
        %852 = vmatprep.subr.bf16.mxu0 %v684
        %853 = vmatpush1.bf16.msra.mxu0 %v683
        %854 = vmatprep.subr.bf16.mxu0 %v687
        %855 = vmatpush1.bf16.msra.mxu0 %v686
        %856 = vmatprep.subr.bf16.mxu0 %v690
        %857 = vmatpush1.bf16.msra.mxu0 %v689
        %858 = vmatprep.subr.bf16.mxu0 %v693
        %859 = vmatpush1.bf16.msra.mxu0 %v692
        %860 = vmatprep.subr.bf16.mxu0 %v696
        %861 = vmatpush1.bf16.msra.mxu0 %v695
        %862 = vmatprep.subr.bf16.mxu0 %v699
        %863 = vmatpush1.bf16.msra.mxu0 %v698
        %864 = vmatprep.subr.bf16.mxu0 %v702
        %865 = vmatpush1.bf16.msra.mxu0 %v701
        %866 = vmatprep.subr.bf16.mxu0 %v705
        %867 = vmatpush1.bf16.msra.mxu0 %v704
        %868 = vmatprep.subr.bf16.mxu0 0
        %869 = vmatpush1.bf16.msra.mxu0 0
        %870 = vmatprep.subr.bf16.mxu0 0
        %871 = vmatpush1.bf16.msra.mxu0 0
        %872 = vmatprep.subr.bf16.mxu0 0
        %873 = vmatpush1.bf16.msra.mxu0 0
        %874 = vmatprep.subr.bf16.mxu0 0
        %875 = vmatpush1.bf16.msra.mxu0 0
        %876 = vmatprep.subr.bf16.mxu0 0
        %877 = vmatpush1.bf16.msra.mxu0 0
        %878 = vmatprep.subr.bf16.mxu0 0
        %879 = vmatpush1.bf16.msra.mxu0 0
        %880 = vmatprep.subr.bf16.mxu0 0
        %881 = vmatpush1.bf16.msra.mxu0 0
        %882 = vmatprep.subr.bf16.mxu0 0
        %883 = vmatpush1.bf16.msra.mxu0 0
        %884 = vmatprep.mubr.bf16.mxu0 0
        %885 = vmatmul.mubr.bf16.gmra.mrb[0].mxu0 %v289
        %v886 = vpop.f32.mrb[0].mxu0
        %v887 = vadd.f32 %v814, %v886
        %v888 = vpop.f32.mrb[0].mxu0
        %v889 = vadd.f32 %v816, %v888
        %v890 = vpop.f32.mrb[0].mxu0
        %v891 = vadd.f32 %v818, %v890
        %v892 = vpop.f32.mrb[0].mxu0
        %v893 = vadd.f32 %v820, %v892
        %894 = vmatprep.mubr.bf16.mxu0 0
        %895 = vmatmul.mubr.bf16.gmra.mrb[0].mxu0 %v292
        %v896 = vpop.f32.mrb[0].mxu0
        %v897 = vadd.f32 %v824, %v896
        %v898 = vpop.f32.mrb[0].mxu0
        %v899 = vadd.f32 %v826, %v898
        %v900 = vpop.f32.mrb[0].mxu0
        %v901 = vadd.f32 %v828, %v900
        %v902 = vpop.f32.mrb[0].mxu0
        %v903 = vadd.f32 %v830, %v902
        %904 = vmatprep.mubr.bf16.mxu0 0
        %905 = vmatmul.mubr.bf16.gmra.mrb[0].mxu0 %v295
        %v906 = vpop.f32.mrb[0].mxu0
        %v907 = vadd.f32 %v834, %v906
        %v908 = vpop.f32.mrb[0].mxu0
        %v909 = vadd.f32 %v836, %v908
        %v910 = vpop.f32.mrb[0].mxu0
        %v911 = vadd.f32 %v838, %v910
        %v912 = vpop.f32.mrb[0].mxu0
        %v913 = vadd.f32 %v840, %v912
        %914 = vmatprep.mubr.bf16.mxu0 0
        %915 = vmatmul.mubr.bf16.gmra.mrb[0].mxu0 %v298
        %v916 = vpop.f32.mrb[0].mxu0
        %v917 = vadd.f32 %v844, %v916
        %v918 = vpop.f32.mrb[0].mxu0
        %v919 = vadd.f32 %v846, %v918
        %v920 = vpop.f32.mrb[0].mxu0
        %v921 = vadd.f32 %v848, %v920
        %v922 = vpop.f32.mrb[0].mxu0
        %v923 = vadd.f32 %v850, %v922
        %924 = vdwg.mxu0
        %925 = vmatprep.subr.bf16.mxu0 0
        %926 = vmatpush1.bf16.msra.mxu0 %v637
        %927 = vmatprep.subr.bf16.mxu0 0
        %928 = vmatpush1.bf16.msra.mxu0 %v640
        %929 = vmatprep.subr.bf16.mxu0 0
        %930 = vmatpush1.bf16.msra.mxu0 %v643
        %931 = vmatprep.subr.bf16.mxu0 0
        %932 = vmatpush1.bf16.msra.mxu0 %v646
        %933 = vmatprep.subr.bf16.mxu0 0
        %934 = vmatpush1.bf16.msra.mxu0 %v649
        %935 = vmatprep.subr.bf16.mxu0 0
        %936 = vmatpush1.bf16.msra.mxu0 %v652
        %937 = vmatprep.subr.bf16.mxu0 0
        %938 = vmatpush1.bf16.msra.mxu0 %v655
        %939 = vmatprep.subr.bf16.mxu0 0
        %940 = vmatpush1.bf16.msra.mxu0 %v658
        %941 = vmatprep.subr.bf16.mxu0 0
        %942 = vmatpush1.bf16.msra.mxu0 %v661
        %943 = vmatprep.subr.bf16.mxu0 0
        %944 = vmatpush1.bf16.msra.mxu0 %v664
        %945 = vmatprep.subr.bf16.mxu0 0
        %946 = vmatpush1.bf16.msra.mxu0 %v667
        %947 = vmatprep.subr.bf16.mxu0 0
        %948 = vmatpush1.bf16.msra.mxu0 %v670
        %949 = vmatprep.subr.bf16.mxu0 0
        %950 = vmatpush1.bf16.msra.mxu0 %v673
        %951 = vmatprep.subr.bf16.mxu0 0
        %952 = vmatpush1.bf16.msra.mxu0 %v676
        %953 = vmatprep.subr.bf16.mxu0 0
        %954 = vmatpush1.bf16.msra.mxu0 %v679
        %955 = vmatprep.subr.bf16.mxu0 0
        %956 = vmatpush1.bf16.msra.mxu0 %v682
        %957 = vmatprep.mubr.bf16.mxu0 %v288
        %958 = vmatmul.mubr.bf16.gmra.mrb[0].mxu0 %v287
        %v959 = vpop.f32.mrb[0].mxu0
        %v960 = vadd.f32 0.0, %v959
        %v961 = vpop.f32.mrb[0].mxu0
        %v962 = vpop.f32.mrb[0].mxu0
        %v963 = vadd.f32 0.0, %v962
        %v964 = vpop.f32.mrb[0].mxu0
        %965 = vmatprep.mubr.bf16.mxu0 %v291
        %966 = vmatmul.mubr.bf16.gmra.mrb[0].mxu0 %v290
        %v967 = vpop.f32.mrb[0].mxu0
        %v968 = vadd.f32 0.0, %v967
        %v969 = vpop.f32.mrb[0].mxu0
        %v970 = vpop.f32.mrb[0].mxu0
        %v971 = vadd.f32 0.0, %v970
        %v972 = vpop.f32.mrb[0].mxu0
        %973 = vmatprep.mubr.bf16.mxu0 %v294
        %974 = vmatmul.mubr.bf16.gmra.mrb[0].mxu0 %v293
        %v975 = vpop.f32.mrb[0].mxu0
        %v976 = vadd.f32 0.0, %v975
        %v977 = vpop.f32.mrb[0].mxu0
        %v978 = vpop.f32.mrb[0].mxu0
        %v979 = vadd.f32 0.0, %v978
        %v980 = vpop.f32.mrb[0].mxu0
        %981 = vmatprep.mubr.bf16.mxu0 %v297
        %982 = vmatmul.mubr.bf16.gmra.mrb[0].mxu0 %v296
        %v983 = vpop.f32.mrb[0].mxu0
        %v984 = vadd.f32 0.0, %v983
        %v985 = vpop.f32.mrb[0].mxu0
        %v986 = vpop.f32.mrb[0].mxu0
        %v987 = vadd.f32 0.0, %v986
        %v988 = vpop.f32.mrb[0].mxu0
        %989 = vdwg.mxu0
        %990 = vmatprep.subr.bf16.mxu0 0
        %991 = vmatpush1.bf16.msra.mxu0 %v685
        %992 = vmatprep.subr.bf16.mxu0 0
        %993 = vmatpush1.bf16.msra.mxu0 %v688
        %994 = vmatprep.subr.bf16.mxu0 0
        %995 = vmatpush1.bf16.msra.mxu0 %v691
        %996 = vmatprep.subr.bf16.mxu0 0
        %997 = vmatpush1.bf16.msra.mxu0 %v694
        %998 = vmatprep.subr.bf16.mxu0 0
        %999 = vmatpush1.bf16.msra.mxu0 %v697
        %1000 = vmatprep.subr.bf16.mxu0 0
        %1001 = vmatpush1.bf16.msra.mxu0 %v700
        %1002 = vmatprep.subr.bf16.mxu0 0
        %1003 = vmatpush1.bf16.msra.mxu0 %v703
        %1004 = vmatprep.subr.bf16.mxu0 0
        %1005 = vmatpush1.bf16.msra.mxu0 %v706
        %1006 = vmatprep.subr.bf16.mxu0 0
        %1007 = vmatpush1.bf16.msra.mxu0 0
        %1008 = vmatprep.subr.bf16.mxu0 0
        %1009 = vmatpush1.bf16.msra.mxu0 0
        %1010 = vmatprep.subr.bf16.mxu0 0
        %1011 = vmatpush1.bf16.msra.mxu0 0
        %1012 = vmatprep.subr.bf16.mxu0 0
        %1013 = vmatpush1.bf16.msra.mxu0 0
        %1014 = vmatprep.subr.bf16.mxu0 0
        %1015 = vmatpush1.bf16.msra.mxu0 0
        %1016 = vmatprep.subr.bf16.mxu0 0
        %1017 = vmatpush1.bf16.msra.mxu0 0
        %1018 = vmatprep.subr.bf16.mxu0 0
        %1019 = vmatpush1.bf16.msra.mxu0 0
        %1020 = vmatprep.subr.bf16.mxu0 0
        %1021 = vmatpush1.bf16.msra.mxu0 0
        %1022 = vmatprep.mubr.bf16.mxu0 0
        %1023 = vmatmul.mubr.bf16.gmra.mrb[0].mxu0 %v289
        %v1024 = vpop.f32.mrb[0].mxu0
        %v1025 = vadd.f32 %v960, %v1024
        %v1026 = vpop.f32.mrb[0].mxu0
        %v1027 = vpop.f32.mrb[0].mxu0
        %v1028 = vadd.f32 %v963, %v1027
        %v1029 = vpop.f32.mrb[0].mxu0
        %1030 = vmatprep.mubr.bf16.mxu0 0
        %1031 = vmatmul.mubr.bf16.gmra.mrb[0].mxu0 %v292
        %v1032 = vpop.f32.mrb[0].mxu0
        %v1033 = vadd.f32 %v968, %v1032
        %v1034 = vpop.f32.mrb[0].mxu0
        %v1035 = vpop.f32.mrb[0].mxu0
        %v1036 = vadd.f32 %v971, %v1035
        %v1037 = vpop.f32.mrb[0].mxu0
        %1038 = vmatprep.mubr.bf16.mxu0 0
        %1039 = vmatmul.mubr.bf16.gmra.mrb[0].mxu0 %v295
        %v1040 = vpop.f32.mrb[0].mxu0
        %v1041 = vadd.f32 %v976, %v1040
        %v1042 = vpop.f32.mrb[0].mxu0
        %v1043 = vpop.f32.mrb[0].mxu0
        %v1044 = vadd.f32 %v979, %v1043
        %v1045 = vpop.f32.mrb[0].mxu0
        %1046 = vmatprep.mubr.bf16.mxu0 0
        %1047 = vmatmul.mubr.bf16.gmra.mrb[0].mxu0 %v298
        %v1048 = vpop.f32.mrb[0].mxu0
        %v1049 = vadd.f32 %v984, %v1048
        %v1050 = vpop.f32.mrb[0].mxu0
        %v1051 = vpop.f32.mrb[0].mxu0
        %v1052 = vadd.f32 %v987, %v1051
        %v1053 = vpop.f32.mrb[0].mxu0
        %1054 = vdwg.mxu0
        %s1055 = sld [smem:[#allocation8]]
        %v1056 = vstv %s1055
        %v1057 = vmul.f32 %v887, %v1056
        %v1058 = vmul.f32 %v891, %v1056
        %v1059 = vmul.f32 %v897, %v1056
        %v1060 = vmul.f32 %v901, %v1056
        %v1061 = vmul.f32 %v907, %v1056
        %v1062 = vmul.f32 %v911, %v1056
        %v1063 = vmul.f32 %v917, %v1056
        %v1064 = vmul.f32 %v921, %v1056
        %s1065 = sld [smem:[#allocation9]]
        %v1066 = vstv %s1065
        %v1067 = vadd.f32 %v1057, %v1066
        %v1068 = vadd.f32 %v1058, %v1066
        %v1069 = vadd.f32 %v1059, %v1066
        %v1070 = vadd.f32 %v1060, %v1066
        %v1071 = vadd.f32 %v1061, %v1066
        %v1072 = vadd.f32 %v1062, %v1066
        %v1073 = vadd.f32 %v1063, %v1066
        %v1074 = vadd.f32 %v1064, %v1066
        %1075 = vst [vmem:[%s276] sm:$0xff] %v1067
        %1076 = vst [vmem:[%s276 + $0x8] sm:$0xff] %v1068
        %1077 = vst [vmem:[%s276 + $0x10] sm:$0xff] %v1069
        %1078 = vst [vmem:[%s276 + $0x18] sm:$0xff] %v1070
        %1079 = vst [vmem:[%s276 + $0x20] sm:$0xff] %v1071
        %1080 = vst [vmem:[%s276 + $0x28] sm:$0xff] %v1072
        %1081 = vst [vmem:[%s276 + $0x30] sm:$0xff] %v1073
        %1082 = vst [vmem:[%s276 + $0x38] sm:$0xff] %v1074
        %s1083 = sld [smem:[#allocation8 + $0x1]]
        %v1084 = vstv %s1083
        %v1085 = vmul.f32 %v889, %v1084
        %v1086 = vmul.f32 %v893, %v1084
        %v1087 = vmul.f32 %v899, %v1084
        %v1088 = vmul.f32 %v903, %v1084
        %v1089 = vmul.f32 %v909, %v1084
        %v1090 = vmul.f32 %v913, %v1084
        %v1091 = vmul.f32 %v919, %v1084
        %v1092 = vmul.f32 %v923, %v1084
        %s1093 = sld [smem:[#allocation9 + $0x1]]
        %v1094 = vstv %s1093
        %v1095 = vadd.f32 %v1085, %v1094
        %v1096 = vadd.f32 %v1086, %v1094
        %v1097 = vadd.f32 %v1087, %v1094
        %v1098 = vadd.f32 %v1088, %v1094
        %v1099 = vadd.f32 %v1089, %v1094
        %v1100 = vadd.f32 %v1090, %v1094
        %v1101 = vadd.f32 %v1091, %v1094
        %v1102 = vadd.f32 %v1092, %v1094
        %s1103 = scalar_lea.vmem %s276, 64 [#allocation11]
        %1104 = vst [vmem:[%s1103] sm:$0xff] %v1095
        %1105 = vst [vmem:[%s1103 + $0x8] sm:$0xff] %v1096
        %1106 = vst [vmem:[%s1103 + $0x10] sm:$0xff] %v1097
        %1107 = vst [vmem:[%s1103 + $0x18] sm:$0xff] %v1098
        %1108 = vst [vmem:[%s1103 + $0x20] sm:$0xff] %v1099
        %1109 = vst [vmem:[%s1103 + $0x28] sm:$0xff] %v1100
        %1110 = vst [vmem:[%s1103 + $0x30] sm:$0xff] %v1101
        %1111 = vst [vmem:[%s1103 + $0x38] sm:$0xff] %v1102
        %s1112 = sld [smem:[#allocation8 + $0x2]]
        %v1113 = vstv %s1112
        %v1114 = vmul.f32 %v1025, %v1113
        %v1115 = vmul.f32 %v1028, %v1113
        %v1116 = vmul.f32 %v1033, %v1113
        %v1117 = vmul.f32 %v1036, %v1113
        %v1118 = vmul.f32 %v1041, %v1113
        %v1119 = vmul.f32 %v1044, %v1113
        %v1120 = vmul.f32 %v1049, %v1113
        %v1121 = vmul.f32 %v1052, %v1113
        %s1122 = sld [smem:[#allocation9 + $0x2]]
        %v1123 = vstv %s1122
        %v1124 = vadd.f32 %v1114, %v1123
        %v1125 = vadd.f32 %v1115, %v1123
        %v1126 = vadd.f32 %v1116, %v1123
        %v1127 = vadd.f32 %v1117, %v1123
        %v1128 = vadd.f32 %v1118, %v1123
        %v1129 = vadd.f32 %v1119, %v1123
        %v1130 = vadd.f32 %v1120, %v1123
        %v1131 = vadd.f32 %v1121, %v1123
        %s1132 = scalar_lea.vmem %s276, 128 [#allocation11]
        %1133 = vst [vmem:[%s1132] sm:$0xff] %v1124
        %1134 = vst [vmem:[%s1132 + $0x8] sm:$0xff] %v1125
        %1135 = vst [vmem:[%s1132 + $0x10] sm:$0xff] %v1126
        %1136 = vst [vmem:[%s1132 + $0x18] sm:$0xff] %v1127
        %1137 = vst [vmem:[%s1132 + $0x20] sm:$0xff] %v1128
        %1138 = vst [vmem:[%s1132 + $0x28] sm:$0xff] %v1129
        %1139 = vst [vmem:[%s1132 + $0x30] sm:$0xff] %v1130
        %1140 = vst [vmem:[%s1132 + $0x38] sm:$0xff] %v1131
        %s1141 = sand.u32 %s137, 1
        %s1142 = scalar_lea.sflag [#allocation4], %s1141
        %s1143 = sand.u32 %s137, 1
        %s1144 = smul.addr %s1143, 192
        %s1145 = scalar_lea.vmem [#allocation11], %s1144
        // Predicated region
        $region53: #{tpu_custom_call.1} parent=35 // pred_check
          %p1146 = pneg %p147
        $region54: #{tpu_custom_call.1} parent=35 // pred_check_branch
          %1148 = sbr.rel (%p1146) target = $region56
        $region55: #{tpu_custom_call.1} parent=35 // pred_region
          #allocation13 [shape = 'u32[6]{0}', space=smem, size = 0x18, scoped, tag = 'DMA stride descriptor']
          %s1149 = smul.u32 8, %s28
          %s1151 = ssub.s32 3072, 3072
          %1152 = vsyncadd %s1142, %s1151
          %s1153 = smul.addr %s1149, 2
          %s1154 = sadd.s32 %s29, %s1153
          %s1155 = smul.addr %s1154, 128
          %s1156 = scalar_lea.hbm %s4, %s1155
          %s1158 = sshll.u32 1, 14
          %s1159 = sxor.u32 4294967295, %s1158
          %s1162 = sshll.u32 7, 18
          %s1163 = sxor.u32 4294967295, %s1162
          %s1164 = sand.u32 0, %s1163
          %s1166 = sor.u32 %s1164, 0
          %s1168 = sshll.u32 3, 24
          %s1169 = sxor.u32 4294967295, %s1168
          %s1170 = sand.u32 %s1166, %s1169
          %s1172 = sor.u32 %s1170, 0
          %s1173 = sshll.u32 %s1145, 4
          %s1174 = int_to_ptr.vmem [resolvable:$true] %s1173
          %1180 = sst [smem:[#allocation13]] 1024
          %s1181 = scalar_lea.smem [#allocation13], 1
          %1182 = sst [smem:[%s1181]] 4096
          %s1183 = scalar_lea.smem [#allocation13], 2
          %1184 = sst [smem:[%s1183]] 8
          %s1185 = scalar_lea.smem [#allocation13], 3
          %1186 = sst [smem:[%s1185]] 128
          %s1187 = scalar_lea.smem [#allocation13], 4
          %1188 = sst [smem:[%s1187]] 256
          %s1189 = scalar_lea.smem [#allocation13], 5
          %1190 = sst [smem:[%s1189]] 8
          %1192 = dma.general %s1174, 3072, %s1156, %s1142, [#allocation12], [#allocation13], %s1172, 0
        $region56: #{tpu_custom_call.1} parent=35 // pred_fallthru
          _
      $region36: #{tpu_custom_call.1} parent=5 // pred_fallthru
        _
      %p1193 = scmp.le.s32.totalorder 2, %s19
      // Predicated region
      $region57: #{tpu_custom_call.1} parent=5 // pred_check
        %p1194 = pneg %p1193
      $region58: #{tpu_custom_call.1} parent=5 // pred_check_branch
        %1196 = sbr.rel (%p1194) target = $region60
      $region59: #{tpu_custom_call.1} parent=5 // pred_region
        %s1197 = ssub.s32 %s19, 2
        // Predicated region
        $region61: #{tpu_custom_call.1} parent=59 // pred_check
          %p1198 = pneg %p153
        $region62: #{tpu_custom_call.1} parent=59 // pred_check_branch
          %1200 = sbr.rel (%p1198) target = $region64
        $region63: #{tpu_custom_call.1} parent=59 // pred_region
          %s1201 = sand.u32 %s138, 1
          %s1202 = scalar_lea.sflag [#allocation4], %s1201
          %s1203 = sand.u32 %s138, 1
          %s1204 = smul.addr %s1203, 192
          %s1205 = scalar_lea.vmem [#allocation11], %s1204
          %1206 = dma.done %s1202, 3072
        $region64: #{tpu_custom_call.1} parent=59 // pred_fallthru
          _
      $region60: #{tpu_custom_call.1} parent=5 // pred_fallthru
        _
    $region6: #{tpu_custom_call.1} parent=1 // loop_footer
      %s23 = sadd.s32 1, %s19
    $region7: #{tpu_custom_call.1} parent=1 // loop_footer_branch
      %18 = sbr.rel target = $region3
    $region8: #{tpu_custom_call.1} parent=1 // loop_exit
      _
    %1207 = vsyncpa [#allocation3], 1
    %s1208 = scalar_lea.sflag [#allocation3], 1
    %1209 = vsyncpa %s1208, 1
    %1210 = vsyncpa [#allocation7], 1
    %1211 = vsyncpa [#allocation4], 1
    %s1212 = scalar_lea.sflag [#allocation4], 1
    %1213 = vsyncpa %s1212, 1
    %1214 = vsyncpa [#allocation5], 1
    %s1215 = scalar_lea.sflag [#allocation5], 1
    %1216 = vsyncpa %s1215, 1
    %1217 = vsyncpa [#allocation10], 1

</llo_original>
